<compile_context>
chip_gen: v7x
topology: tpu7x:2x2x1
jax: 0.10.0
libtpu: 0.0.40
codegen_flags: <defaults>
</compile_context>

<pallas_src>
import functools

import numpy as np

import jax
import jax.numpy as jnp
from jax.experimental import pallas as pl
from jax.experimental.pallas import tpu as pltpu


# ----------------------------------------------------------------------------
# pltpu.roll direction probe (tiny kernel, run once, cached).
# We need out[p] = x[p + d]; probe the rotate convention instead of relying on
# a hard-coded sign.
# ----------------------------------------------------------------------------
def _roll_probe_kernel(x_ref, o_ref):
    o_ref[...] = pltpu.roll(x_ref[...], 1, 1)


@functools.lru_cache(maxsize=None)
def _roll_matches_numpy():
    """True if pltpu.roll follows np.roll convention: out[i] = x[i - shift]."""
    with jax.ensure_compile_time_eval():
        x = jnp.broadcast_to(jax.lax.iota(jnp.float32, 128), (8, 128))
        out = pl.pallas_call(
            _roll_probe_kernel,
            out_shape=jax.ShapeDtypeStruct((8, 128), jnp.float32),
        )(x)
        return bool(jax.device_get(out)[0, 0] == 127.0)


# ----------------------------------------------------------------------------
# Static tap geometry: per-tap (dy, dx) offsets and lane-rotate amounts for a
# "same" dilated KxK conv on the row-major flattened H*W spatial axis.
# ----------------------------------------------------------------------------
def _tap_geometry(H, W, ksize, dilation):
    np_like = _roll_matches_numpy()
    HW = H * W
    pad = dilation * (ksize - 1) // 2
    offsets, amounts = [], []
    for ky in range(ksize):
        for kx in range(ksize):
            dy = ky * dilation - pad
            dx = kx * dilation - pad
            offsets.append((dy, dx))
            d = dy * W + dx                       # want out[p] = x[p + d]
            amounts.append(int(((-d) if np_like else d) % HW))
    return tuple(offsets), tuple(amounts)


# ----------------------------------------------------------------------------
# The single fused kernel (one grid step = one full image through the net).
# Activations are (C, HW): the spatial extent sits in the 128-lane dim so
# every vreg, MXU tile and store is lane-dense.
# ----------------------------------------------------------------------------
def _risp_kernel(x_ref, row_ref, col_ref,
                 wh1_ref, bh1_ref, wh2_ref, bh2_ref,
                 wd_ref, bd_ref, wf_ref, bfu_ref, wt_ref, bt_ref,
                 o_ref, *,
                 H, W, nblocks, offsets1, amounts1, offsets2, amounts2):
    bf16 = jnp.bfloat16
    row = row_ref[...]                            # (1, HW) int32
    col = col_ref[...]                            # (1, HW) int32

    # ---- halo masks built in-kernel (VPU compares), reused by every layer --
    def make_masks(offsets):
        ms = []
        for dy, dx in offsets:
            valid = ((row + dy >= 0) & (row + dy < H) &
                     (col + dx >= 0) & (col + dx < W))
            ms.append(valid.astype(jnp.float32))
        return ms

    masks1 = make_masks(offsets1)                 # dilation 1 (head / tail)
    masks2 = make_masks(offsets2)                 # dilation 2 (DRDB dense)

    def im2col(x, amounts, masks):
        """(C, HW) f32 -> (9*C, HW) bf16 tap-major slab via XLU lane rolls."""
        pieces = []
        for amt, m in zip(amounts, masks):
            if amt == 0:                          # centre tap: mask all-ones
                pieces.append(x)
            else:
                pieces.append(pltpu.roll(x, amt, 1) * m)
        return jnp.concatenate(pieces, axis=0).astype(bf16)

    def conv(bias, terms, relu):
        """bias(f32) + sum_i W_i(bf16) @ slab_i(bf16), f32 MXU accumulate."""
        out = bias
        for wm, slab in terms:
            out = out + jnp.dot(wm, slab, preferred_element_type=jnp.float32)
        if relu:
            out = jnp.maximum(out, 0.0)
        return out

    # ---- head: conv3x3+ReLU -> conv3x3+ReLU --------------------------------
    x = x_ref[0]
    h = conv(bh1_ref[...], [(wh1_ref[...], im2col(x, amounts1, masks1))], True)
    h = conv(bh2_ref[...], [(wh2_ref[...], im2col(h, amounts1, masks1))], True)
    x0 = h                                        # global skip, stays in VMEM

    # ---- body: 6 DRDBs; incremental im2col + per-block matmul accumulation -
    for i in range(nblocks):
        xi = h
        s0 = im2col(xi, amounts2, masks2)         # built once, reused 3x
        d1 = conv(bd_ref[3 * i + 0], [(wd_ref[6 * i + 0], s0)], True)
        s1 = im2col(d1, amounts2, masks2)         # built once, reused 2x
        d2 = conv(bd_ref[3 * i + 1],
                  [(wd_ref[6 * i + 1], s0), (wd_ref[6 * i + 2], s1)], True)
        s2 = im2col(d2, amounts2, masks2)
        d3 = conv(bd_ref[3 * i + 2],
                  [(wd_ref[6 * i + 3], s0), (wd_ref[6 * i + 4], s1),
                   (wd_ref[6 * i + 5], s2)], True)
        # 1x1 fuse conv decomposed per channel block -> no dense concat at all
        f = conv(bfu_ref[i],
                 [(wf_ref[4 * i + 0], xi.astype(bf16)),
                  (wf_ref[4 * i + 1], d1.astype(bf16)),
                  (wf_ref[4 * i + 2], d2.astype(bf16)),
                  (wf_ref[4 * i + 3], d3.astype(bf16))], False)
        h = xi + f                                # DRDB residual (f32)

    # ---- tail: global residual + conv3x3, clip fused into the epilogue -----
    xt = h + x0
    t = conv(bt_ref[...], [(wt_ref[...], im2col(xt, amounts1, masks1))], False)
    o_ref[0] = jnp.clip(t, 0.0, 1.0)


# ----------------------------------------------------------------------------
# Host-side plumbing
# ----------------------------------------------------------------------------
def _const_spec(arr):
    zeros = (0,) * arr.ndim
    return pl.BlockSpec(arr.shape, lambda n, _z=zeros: _z)


def _w_to_mat(w):
    """(kh, kw, Cin, Cout) HWIO weight -> (Cout, kh*kw*Cin) bf16, tap-major."""
    kh, kw, ci, co = w.shape
    return (jnp.transpose(w, (3, 0, 1, 2))
            .reshape(co, kh * kw * ci).astype(jnp.bfloat16))


def _b_to_col(b):
    return b.reshape(-1, 1).astype(jnp.float32)


def pack_raw_nchw(x):
    """(N, 3, H, W) -> (N, 4, H/2, W/2), matching pack_raw_tensor."""
    o0 = x[:, 0, 0::2, 0::2]
    o1 = x[:, 1, 0::2, 1::2]
    o2 = x[:, 1, 1::2, 0::2]
    o3 = x[:, 2, 1::2, 1::2]
    return jnp.stack([o0, o1, o2, o3], axis=1)


def risp_forward_pallas(params, xin_nchw):
    N, Cin, H, W = xin_nchw.shape
    HW = H * W
    nf = params["head"][0][0].shape[-1]
    nblocks = len(params["body"])

    offsets1, amounts1 = _tap_geometry(H, W, 3, 1)   # head / tail convs
    offsets2, amounts2 = _tap_geometry(H, W, 3, 2)   # dilated DRDB convs

    # flatten spatial dims into the lane axis: (N, C, H, W) -> (N, C, H*W)
    cin_p = Cin + (-Cin) % 8                          # sublane-align input chans
    x = xin_nchw.reshape(N, Cin, HW)
    x = jnp.pad(x, ((0, 0), (0, cin_p - Cin), (0, 0)))

    # tiny resident row/col index vectors (replace the f32 mask tables)
    row_idx = jnp.asarray((np.arange(HW, dtype=np.int32) // W).reshape(1, HW))
    col_idx = jnp.asarray((np.arange(HW, dtype=np.int32) % W).reshape(1, HW))

    # ---- parameter packing: bf16 matmul operands, f32 biases ---------------
    (w1, b1), (w2, b2) = params["head"]
    w1 = jnp.pad(w1, ((0, 0), (0, 0), (0, cin_p - Cin), (0, 0)))
    wh1, bh1 = _w_to_mat(w1), _b_to_col(b1)
    wh2, bh2 = _w_to_mat(w2), _b_to_col(b2)

    wd, bd, wf, bfu = [], [], [], []
    for blk in params["body"]:
        for li, (w, b) in enumerate(blk["dense"]):
            # split (3,3,(li+1)*nf,nf) into per-channel-block (nf, 9*nf) mats
            # so previously built im2col slabs are reused (incremental im2col)
            for bi in range(li + 1):
                wd.append(_w_to_mat(w[:, :, bi * nf:(bi + 1) * nf, :]))
            bd.append(_b_to_col(b))
        wfz, bfz = blk["fuse"]                        # 1x1 fuse, Cin = 4*nf
        for bi in range(4):
            wf.append(_w_to_mat(wfz[:, :, bi * nf:(bi + 1) * nf, :]))
        bfu.append(_b_to_col(bfz))
    wd = jnp.stack(wd)                                # (6*nb, nf, 9*nf) bf16
    bd = jnp.stack(bd)                                # (3*nb, nf, 1)    f32
    wf = jnp.stack(wf)                                # (4*nb, nf, nf)   bf16
    bfu = jnp.stack(bfu)                              # (nb,   nf, 1)    f32

    wt_, bt_ = params["tail"]
    cout = wt_.shape[-1]
    cout_p = cout + (-cout) % 8                       # full-sublane output store
    wt = _w_to_mat(jnp.pad(wt_, ((0, 0), (0, 0), (0, 0), (0, cout_p - cout))))
    bt = _b_to_col(jnp.pad(bt_, ((0, cout_p - cout),)))

    consts = (row_idx, col_idx, wh1, bh1, wh2, bh2, wd, bd, wf, bfu, wt, bt)

    out = pl.pallas_call(
        functools.partial(
            _risp_kernel, H=H, W=W, nblocks=nblocks,
            offsets1=offsets1, amounts1=amounts1,
            offsets2=offsets2, amounts2=amounts2),
        out_shape=jax.ShapeDtypeStruct((N, cout_p, HW), jnp.float32),
        grid_spec=pltpu.PrefetchScalarGridSpec(
            num_scalar_prefetch=0,
            grid=(N,),
            in_specs=[pl.BlockSpec((1, cin_p, HW), lambda n: (n, 0, 0))]
                     + [_const_spec(c) for c in consts],
            out_specs=pl.BlockSpec((1, cout_p, HW), lambda n: (n, 0, 0)),
        ),
        compiler_params=pltpu.CompilerParams(
            dimension_semantics=("parallel",),        # v7x: 2 TCs split batch
            vmem_limit_bytes=48 * 1024 * 1024),
    )(x, *consts)

    # clip already fused in-kernel; pack_raw (stride-2 Bayer select) stays in
    # XLA -- TODO(synk): fold it into the tail epilogue as well.
    t = out[:, :cout, :].reshape(N, cout, H, W)
    return pack_raw_nchw(t)


# ----------------------------------------------------------------------------
# Parameter construction (deterministic, synthetic)
# ----------------------------------------------------------------------------
def _init_conv(key, cin, cout, k):
    k1, k2 = jax.random.split(key)
    w = jax.random.normal(k1, (k, k, cin, cout), jnp.float32) * 0.05
    b = jax.random.normal(k2, (cout,), jnp.float32) * 0.01
    return w, b


def init_risp_params(key, nfeat):
    keys = iter(jax.random.split(key, 64))
    params = {}
    params["head"] = [_init_conv(next(keys), 3, nfeat, 3),
                      _init_conv(next(keys), nfeat, nfeat, 3)]
    body = []
    for _ in range(6):
        dense = []
        cin = nfeat
        for _ in range(3):                  # nDenselayer = 3, growth = nFeat
            dense.append(_init_conv(next(keys), cin, nfeat, 3))
            cin += nfeat
        fuse = _init_conv(next(keys), cin, nfeat, 1)
        body.append({"dense": dense, "fuse": fuse})
    params["body"] = body
    params["tail"] = _init_conv(next(keys), nfeat, 3, 3)
    return params


# ----------------------------------------------------------------------------
# Pure-JAX reference (for correctness check)
# ----------------------------------------------------------------------------
def _ref_conv(x, w, b, *, ksize, dilation=1, relu=True):
    pad = dilation * (ksize - 1) // 2
    out = jax.lax.conv_general_dilated(
        x, w, window_strides=(1, 1),
        padding=[(pad, pad), (pad, pad)],
        rhs_dilation=(dilation, dilation),
        dimension_numbers=("NHWC", "HWIO", "NHWC"),
        precision=jax.lax.Precision.HIGHEST)
    out = out + b
    return jnp.maximum(out, 0.0) if relu else out


def risp_forward_ref(params, xin_nchw):
    x = jnp.transpose(xin_nchw, (0, 2, 3, 1))
    for (w, b) in params["head"]:
        x = _ref_conv(x, w, b, ksize=3, dilation=1, relu=True)
    x0 = x
    for blk in params["body"]:
        y = x
        for (w, b) in blk["dense"]:
            out = _ref_conv(y, w, b, ksize=3, dilation=2, relu=True)
            y = jnp.concatenate([y, out], axis=-1)
        wf, bf = blk["fuse"]
        y = _ref_conv(y, wf, bf, ksize=1, dilation=1, relu=False)
        x = x + y
    x = x + x0
    wt, bt = params["tail"]
    x = _ref_conv(x, wt, bt, ksize=3, dilation=1, relu=False)
    return jnp.clip(pack_raw_nchw(jnp.transpose(x, (0, 3, 1, 2))), 0.0, 1.0)


if __name__ == "__main__":
    # run the tiny roll-direction probe eagerly (outside any jit trace)
    _roll_matches_numpy()

    key = jax.random.PRNGKey(0)
    k_par, k_in = jax.random.split(key)

    nfeat = 8
    N, H, W = 2, 16, 16
    params = init_risp_params(k_par, nfeat)
    xin = jax.random.uniform(k_in, (N, 3, H, W), jnp.float32)   # NCHW, like torch

    out = jax.block_until_ready(jax.jit(risp_forward_pallas)(params, xin))
    assert out.shape == (N, 4, H // 2, W // 2), out.shape

    ref = jax.block_until_ready(risp_forward_ref(params, xin))
    err = float(jnp.max(jnp.abs(out - ref)))
    # bf16 MXU operands (f32 accumulate) -> slightly looser tolerance than f32
    assert jnp.allclose(out, ref, atol=1e-2, rtol=1e-2), err

    print("KERNEL_OK")
</pallas_src>

<mosaic_0001>
module attributes {stable_mosaic.version = 11 : i64} {
  func.func @_roll_probe_kernel(%arg0: memref<8x128xf32, #tpu.memory_space<vmem>>, %arg1: memref<8x128xf32, #tpu.memory_space<vmem>>) attributes {dimension_semantics = [], scalar_prefetch = 0 : i64, scratch_operands = 0 : i64, tpu.core_type = #tpu.core_type<tc>} {
    %c0 = arith.constant 0 : index
    %c0_0 = arith.constant 0 : index
    %0 = vector.load %arg0[%c0, %c0_0] : memref<8x128xf32, #tpu.memory_space<vmem>>, vector<8x128xf32>
    %c1_i32 = arith.constant 1 : i32
    %1 = tpu.dynamic_rotate %0 by %c1_i32 dim 1 : vector<8x128xf32>, i32 -> vector<8x128xf32>
    %c0_1 = arith.constant 0 : index
    %c0_2 = arith.constant 0 : index
    %2 = vector.load %arg1[%c0_1, %c0_2] : memref<8x128xf32, #tpu.memory_space<vmem>>, vector<8x128xf32>
    tpu.vector_store %arg1[%c0_1, %c0_2], %1 {strides = array<i32>} : memref<8x128xf32, #tpu.memory_space<vmem>>, vector<8x128xf32>,
    return
  }
}

</mosaic_0001>

<llo_original>
// kernel: tpu_custom_call.1
$region0: #{tpu_custom_call.1}
  #allocation0 [shape = 'u32[]', space=smem, size = 0x4, offset = 0x4, fixed_abs, tag = 'smem constant byte address 0x4 - core index']
  #allocation1 [shape = 'u32[144,128]{1,0:T(1,128)}', space=vmem, size = 0x12000, scoped, tag = 'internal scratch']
  %s0 = inlined_call_operand.hbm [shape: f32[8,128], index: 0, kind: input, shape index: {}]
  %s1 = inlined_call_operand.hbm [shape: f32[8,128], index: 1, kind: output, shape index: {}]
  %s2 = sld [smem:[#allocation0]]
  $region18: #{tpu_custom_call.1} parent=0
    _
  %s4 = ssub.s32 1, %s2
  %s5 = scalar_select 0, %s4, %s2
  $region1: #{tpu_custom_call.1} parent=0
    #allocation2 [shape = 'u8[4096]{0}', space=vmem, size = 0x1000, scoped, tag = 'input window, operand 0, single buffered']
    #allocation3 [shape = 's32[1]{0}', space=sflag, size = 0x4, scoped, tag = 'scoped memory for tpu_custom_call.1']
    #allocation4 [shape = 's32[1]{0}', space=sflag, size = 0x4, scoped, tag = 'scoped memory for tpu_custom_call.1']
    #allocation5 [shape = 'u8[4096]{0}', space=vmem, size = 0x1000, scoped, tag = 'output window, operand 0, single buffered']
    %6 = vsyncpa [#allocation3], 0
    %7 = vsyncpa [#allocation4], 0
    // Predicated region
    $region2: #{tpu_custom_call.1} parent=1 // pred_check
      _
    $region3: #{tpu_custom_call.1} parent=1 // pred_check_branch
      %9 = sbr.rel (0) target = $region5
    $region4: #{tpu_custom_call.1} parent=1 // pred_region
      %s11 = ssub.s32 128, 128
      %12 = vsyncadd [#allocation3], %s11
      %s14 = sshll.u32 [#allocation2], 4
      %s15 = int_to_ptr.vmem [resolvable:$true] %s14
      %17 = dma.hbm_to_vmem [thread:$0]  %s0, 128, %s15, [#allocation3]
    $region5: #{tpu_custom_call.1} parent=1 // pred_fallthru
      _
    // Predicated region
    $region6: #{tpu_custom_call.1} parent=1 // pred_check
      _
    $region7: #{tpu_custom_call.1} parent=1 // pred_check_branch
      %19 = sbr.rel (0) target = $region9
    $region8: #{tpu_custom_call.1} parent=1 // pred_region
      %20 = dma.done [#allocation3], 128
    $region9: #{tpu_custom_call.1} parent=1 // pred_fallthru
      _
    %v21 = vld [vmem:[#allocation2] sm:$0xff]
    %22 = vrot.lane.b32.xlu0 %v21, 1
    %v23 = vpop.permute.xlu0 %22
    %24 = vst [vmem:[#allocation5] sm:$0xff] %v23
    // Predicated region
    $region10: #{tpu_custom_call.1} parent=1 // pred_check
      _
    $region11: #{tpu_custom_call.1} parent=1 // pred_check_branch
      %26 = sbr.rel (0) target = $region13
    $region12: #{tpu_custom_call.1} parent=1 // pred_region
      %s28 = ssub.s32 128, 128
      %29 = vsyncadd [#allocation4], %s28
      %s31 = sshll.u32 [#allocation5], 4
      %s32 = int_to_ptr.vmem [resolvable:$true] %s31
      %34 = dma.vmem_to_hbm [thread:$0]  %s32, 128, %s1, [#allocation4]
    $region13: #{tpu_custom_call.1} parent=1 // pred_fallthru
      _
    // Predicated region
    $region14: #{tpu_custom_call.1} parent=1 // pred_check
      _
    $region15: #{tpu_custom_call.1} parent=1 // pred_check_branch
      %36 = sbr.rel (0) target = $region17
    $region16: #{tpu_custom_call.1} parent=1 // pred_region
      %37 = dma.done [#allocation4], 128
    $region17: #{tpu_custom_call.1} parent=1 // pred_fallthru
      _
    %38 = vsyncpa [#allocation3], 1
    %39 = vsyncpa [#allocation4], 1

</llo_original>
